<compile_context>
chip_gen: v7x
topology: tpu7x:2x2x1
jax: 0.10.0
libtpu: 0.0.40
codegen_flags: <defaults>
</compile_context>

<pallas_src>
import jax
import jax.numpy as jnp
from jax.experimental import pallas as pl
from jax.experimental.pallas import tpu as pltpu


_GELU_C = 0.7978845608028654  # sqrt(2/pi)


def _gelu_tanh(h):
    return 0.5 * h * (1.0 + jnp.tanh(_GELU_C * (h + 0.044715 * h * h * h)))


def _mlp_kernel(x_ref, w1_ref, b1_ref, w2_ref, b2_ref, o_ref):
    # x_ref : (1, C_in, ts)   w1_ref: (hidden, C_in)   b1_ref: (hidden, 1)
    # o_ref : (1, C_out, ts)  w2_ref: (C_out, hidden)  b2_ref: (C_out, 1)
    x = x_ref[0]                                                   # (C_in, ts)

    h = jnp.dot(w1_ref[...], x, preferred_element_type=jnp.float32)
    h = h + b1_ref[...]                                            # (hidden, ts)
    h = _gelu_tanh(h)

    y = jnp.dot(w2_ref[...], h.astype(w2_ref.dtype),
                preferred_element_type=jnp.float32)
    y = y + b2_ref[...]                                            # (C_out, ts)

    o_ref[0] = y.astype(o_ref.dtype)


def _pick_spatial_tile(S):
    # Largest lane-aligned tile dividing S (keeps output stores unmasked).
    for t in (2048, 1024, 512, 256, 128):
        if S % t == 0:
            return t
    return S  # small/odd spatial extent: single full block


def mlp_pallas(x, w1, b1, w2, b2, *, tile_s=None):
    """Equivalent of Mlp.forward: fc2(GELU(fc1(x))) with 1x1 convs, NCHW in/out."""
    B, C_in, H, W = x.shape
    hidden, c_in_w = w1.shape
    C_out, hidden_w = w2.shape
    assert c_in_w == C_in and hidden_w == hidden
    S = H * W

    x3 = x.reshape(B, C_in, S)            # free reshape, stays in NCHW order
    b1c = b1.reshape(hidden, 1)
    b2c = b2.reshape(C_out, 1)

    if tile_s is None:
        tile_s = _pick_spatial_tile(S)
    n_s = S // tile_s

    out3 = pl.pallas_call(
        _mlp_kernel,
        out_shape=jax.ShapeDtypeStruct((B, C_out, S), x.dtype),
        grid_spec=pltpu.PrefetchScalarGridSpec(
            num_scalar_prefetch=0,
            grid=(B, n_s),
            in_specs=[
                pl.BlockSpec((1, C_in, tile_s), lambda b, s: (b, 0, s)),
                pl.BlockSpec((hidden, C_in), lambda b, s: (0, 0)),
                pl.BlockSpec((hidden, 1), lambda b, s: (0, 0)),
                pl.BlockSpec((C_out, hidden), lambda b, s: (0, 0)),
                pl.BlockSpec((C_out, 1), lambda b, s: (0, 0)),
            ],
            out_specs=pl.BlockSpec((1, C_out, tile_s), lambda b, s: (b, 0, s)),
        ),
        compiler_params=pltpu.CompilerParams(
            dimension_semantics=("parallel", "parallel")),
    )(x3, w1, b1c, w2, b2c)

    return out3.reshape(B, C_out, H, W)


def mlp_ref(x, w1, b1, w2, b2):
    """Pure-JAX reference with the same (tanh) GELU."""
    B, C_in, H, W = x.shape
    x3 = x.reshape(B, C_in, H * W).astype(jnp.float32)
    h = jnp.einsum('hc,bcs->bhs', w1.astype(jnp.float32), x3) + b1[None, :, None]
    h = _gelu_tanh(h)
    y = jnp.einsum('oh,bhs->bos', w2.astype(jnp.float32), h) + b2[None, :, None]
    return y.reshape(B, w2.shape[0], H, W).astype(x.dtype)


if __name__ == "__main__":
    key = jax.random.PRNGKey(0)
    B, C_in, H, W = 2, 4, 16, 16
    hidden, C_out = 32, 4

    k1, k2, k3, k4, k5 = jax.random.split(key, 5)
    x = jax.random.normal(k1, (B, C_in, H, W), dtype=jnp.float32)
    w1 = 0.5 * jax.random.normal(k2, (hidden, C_in), dtype=jnp.float32)
    b1 = 0.1 * jax.random.normal(k3, (hidden,), dtype=jnp.float32)
    w2 = 0.5 * jax.random.normal(k4, (C_out, hidden), dtype=jnp.float32)
    b2 = 0.1 * jax.random.normal(k5, (C_out,), dtype=jnp.float32)

    out = jax.block_until_ready(mlp_pallas(x, w1, b1, w2, b2))
    ref = mlp_ref(x, w1, b1, w2, b2)

    assert out.shape == ref.shape, (out.shape, ref.shape)
    assert jnp.allclose(out, ref, atol=1e-5, rtol=1e-5), float(
        jnp.max(jnp.abs(out - ref)))

    print("KERNEL_OK")
</pallas_src>

<mosaic_0001>
module attributes {stable_mosaic.version = 11 : i64} {
  func.func @_mlp_kernel(%arg0: i32, %arg1: i32, %arg2: memref<1x4x256xf32, #tpu.memory_space<vmem>>, %arg3: memref<32x4xf32, #tpu.memory_space<vmem>>, %arg4: memref<32x1xf32, #tpu.memory_space<vmem>>, %arg5: memref<4x32xf32, #tpu.memory_space<vmem>>, %arg6: memref<4x1xf32, #tpu.memory_space<vmem>>, %arg7: memref<1x4x256xf32, #tpu.memory_space<vmem>>) attributes {dimension_semantics = [#tpu.dimension_semantics<parallel>, #tpu.dimension_semantics<parallel>], iteration_bounds = array<i64: 2, 1>, scalar_prefetch = 0 : i64, scratch_operands = 0 : i64, tpu.core_type = #tpu.core_type<tc>, window_params = [{transform_indices = @transform_0, window_bounds = array<i64: 1, 4, 256>}, {pipeline_mode = #tpu.pipeline_mode<synchronous>, transform_indices = @transform_1, window_bounds = array<i64: 32, 4>}, {pipeline_mode = #tpu.pipeline_mode<synchronous>, transform_indices = @transform_2, window_bounds = array<i64: 32, 1>}, {pipeline_mode = #tpu.pipeline_mode<synchronous>, transform_indices = @transform_3, window_bounds = array<i64: 4, 32>}, {pipeline_mode = #tpu.pipeline_mode<synchronous>, transform_indices = @transform_4, window_bounds = array<i64: 4, 1>}, {transform_indices = @transform_5, window_bounds = array<i64: 1, 4, 256>}]} {
    %c0 = arith.constant 0 : index
    %c0_0 = arith.constant 0 : index
    %c0_1 = arith.constant 0 : index
    %0 = vector.load %arg2[%c0, %c0_0, %c0_1] : memref<1x4x256xf32, #tpu.memory_space<vmem>>, vector<1x4x256xf32>
    %1 = vector.shape_cast %0 : vector<1x4x256xf32> to vector<4x256xf32>
    %c0_2 = arith.constant 0 : index
    %c0_3 = arith.constant 0 : index
    %2 = vector.load %arg3[%c0_2, %c0_3] : memref<32x4xf32, #tpu.memory_space<vmem>>, vector<32x4xf32>
    %cst = arith.constant dense<0.000000e+00> : vector<32x256xf32>
    %3 = tpu.matmul %2, %1, %cst {dimension_numbers = #tpu.dot_dimension_numbers<[1], [0], [0], [1], [0, 0, 1, 1], [], []>} : vector<32x4xf32>, vector<4x256xf32>, vector<32x256xf32> -> vector<32x256xf32>
    %c0_4 = arith.constant 0 : index
    %c0_5 = arith.constant 0 : index
    %4 = vector.load %arg4[%c0_4, %c0_5] : memref<32x1xf32, #tpu.memory_space<vmem>>, vector<32x1xf32>
    %5 = vector.broadcast %4 : vector<32x1xf32> to vector<32x256xf32>
    %6 = arith.addf %3, %5 : vector<32x256xf32>
    %cst_6 = arith.constant 5.000000e-01 : f32
    %7 = vector.broadcast %cst_6 : f32 to vector<32x256xf32>
    %8 = arith.mulf %7, %6 : vector<32x256xf32>
    %cst_7 = arith.constant 4.471500e-02 : f32
    %9 = vector.broadcast %cst_7 : f32 to vector<32x256xf32>
    %10 = arith.mulf %9, %6 : vector<32x256xf32>
    %11 = arith.mulf %10, %6 : vector<32x256xf32>
    %12 = arith.mulf %11, %6 : vector<32x256xf32>
    %13 = arith.addf %6, %12 : vector<32x256xf32>
    %cst_8 = arith.constant 0.797884583 : f32
    %14 = vector.broadcast %cst_8 : f32 to vector<32x256xf32>
    %15 = arith.mulf %14, %13 : vector<32x256xf32>
    %16 = math.tanh %15 : vector<32x256xf32>
    %cst_9 = arith.constant 1.000000e+00 : f32
    %17 = vector.broadcast %cst_9 : f32 to vector<32x256xf32>
    %18 = arith.addf %17, %16 : vector<32x256xf32>
    %19 = arith.mulf %8, %18 : vector<32x256xf32>
    %c0_10 = arith.constant 0 : index
    %c0_11 = arith.constant 0 : index
    %20 = vector.load %arg5[%c0_10, %c0_11] : memref<4x32xf32, #tpu.memory_space<vmem>>, vector<4x32xf32>
    %cst_12 = arith.constant dense<0.000000e+00> : vector<4x256xf32>
    %21 = tpu.matmul %20, %19, %cst_12 {dimension_numbers = #tpu.dot_dimension_numbers<[1], [0], [0], [1], [0, 0, 1, 1], [], []>} : vector<4x32xf32>, vector<32x256xf32>, vector<4x256xf32> -> vector<4x256xf32>
    %c0_13 = arith.constant 0 : index
    %c0_14 = arith.constant 0 : index
    %22 = vector.load %arg6[%c0_13, %c0_14] : memref<4x1xf32, #tpu.memory_space<vmem>>, vector<4x1xf32>
    %23 = vector.broadcast %22 : vector<4x1xf32> to vector<4x256xf32>
    %24 = arith.addf %21, %23 : vector<4x256xf32>
    %c0_15 = arith.constant 0 : index
    %c0_16 = arith.constant 0 : index
    %c0_17 = arith.constant 0 : index
    %25 = vector.load %arg7[%c0_15, %c0_16, %c0_17] : memref<1x4x256xf32, #tpu.memory_space<vmem>>, vector<1x4x256xf32>
    %26 = vector.shape_cast %25 : vector<1x4x256xf32> to vector<4x256xf32>
    %27 = vector.shape_cast %24 : vector<4x256xf32> to vector<1x4x256xf32>
    tpu.vector_store %arg7[%c0_15, %c0_16, %c0_17], %27 {strides = array<i32>} : memref<1x4x256xf32, #tpu.memory_space<vmem>>, vector<1x4x256xf32>,
    return
  }
  func.func @transform_0(%arg0: i32, %arg1: i32) -> (i32, i32, i32) {
    %c0_i32 = arith.constant 0 : i32
    %c0_i32_0 = arith.constant 0 : i32
    return %arg0, %c0_i32, %arg1 : i32, i32, i32
  }
  func.func @transform_1(%arg0: i32, %arg1: i32) -> (i32, i32) {
    %c0_i32 = arith.constant 0 : i32
    %c0_i32_0 = arith.constant 0 : i32
    %c0_i32_1 = arith.constant 0 : i32
    return %c0_i32, %c0_i32_0 : i32, i32
  }
  func.func @transform_2(%arg0: i32, %arg1: i32) -> (i32, i32) {
    %c0_i32 = arith.constant 0 : i32
    %c0_i32_0 = arith.constant 0 : i32
    %c0_i32_1 = arith.constant 0 : i32
    return %c0_i32, %c0_i32_0 : i32, i32
  }
  func.func @transform_3(%arg0: i32, %arg1: i32) -> (i32, i32) {
    %c0_i32 = arith.constant 0 : i32
    %c0_i32_0 = arith.constant 0 : i32
    %c0_i32_1 = arith.constant 0 : i32
    return %c0_i32, %c0_i32_0 : i32, i32
  }
  func.func @transform_4(%arg0: i32, %arg1: i32) -> (i32, i32) {
    %c0_i32 = arith.constant 0 : i32
    %c0_i32_0 = arith.constant 0 : i32
    %c0_i32_1 = arith.constant 0 : i32
    return %c0_i32, %c0_i32_0 : i32, i32
  }
  func.func @transform_5(%arg0: i32, %arg1: i32) -> (i32, i32, i32) {
    %c0_i32 = arith.constant 0 : i32
    %c0_i32_0 = arith.constant 0 : i32
    return %arg0, %c0_i32, %arg1 : i32, i32, i32
  }
}

</mosaic_0001>

<llo_original>
// kernel: tpu_custom_call.1
$region0: #{tpu_custom_call.1}
  #allocation0 [shape = 'u32[]', space=smem, size = 0x4, offset = 0x4, fixed_abs, tag = 'smem constant byte address 0x4 - core index']
  #allocation1 [shape = 'u32[144,128]{1,0:T(1,128)}', space=vmem, size = 0x12000, scoped, tag = 'internal scratch']
  %s0 = inlined_call_operand.vmem [shape: f32[2,4,256], index: 0, kind: input, shape index: {}]
  %s1 = inlined_call_operand.vmem [shape: f32[32,4], index: 1, kind: input, shape index: {}]
  %s2 = inlined_call_operand.vmem [shape: f32[32,1], index: 2, kind: input, shape index: {}]
  %s3 = inlined_call_operand.vmem [shape: f32[4,32], index: 3, kind: input, shape index: {}]
  %s4 = inlined_call_operand.vmem [shape: f32[4,1], index: 4, kind: input, shape index: {}]
  %s5 = inlined_call_operand.hbm [shape: f32[2,4,256], index: 5, kind: output, shape index: {}]
  %s6 = sld [smem:[#allocation0]]
  $region53: #{tpu_custom_call.1} parent=0
    _
  %s8 = ssub.s32 1, %s6
  %s9 = scalar_select 0, %s8, %s6
  $region1: #{tpu_custom_call.1} parent=0
    #allocation2 [shape = 'u8[8192]{0}', space=vmem, size = 0x2000, scoped, tag = 'output window, operand 0']
    #allocation3 [shape = 's32[2]{0}', space=sflag, size = 0x8, scoped, tag = 'scoped memory for tpu_custom_call.1']
    %10 = vsyncpa [#allocation3], 0
    %s11 = scalar_lea.sflag [#allocation3], 1
    %12 = vsyncpa %s11, 0
    loop: start=0, step=1, limit=4
    $region2: #{tpu_custom_call.1} parent=1 // loop_pre_header
      _
    $region3: #{tpu_custom_call.1} parent=1 // loop_header
      %s14 = sphi 0, %s18
      %p15 = scmp.ge.s32.totalorder %s14, 4
      %s21 = sphi 0, %s33
      %s22 = sphi 0, %s29
      %s23 = sphi 0, %s21
      %s24 = sphi 0, %s22
      %s25 = sphi 0, %s23
      %s26 = sphi 0, %s24
      %s38 = sphi 0, %s40
      %s41 = sphi 0, %s38
      %s42 = sphi 0, %s41
      %s58 = sphi 0, %s42
      %s62 = sphi 0, %s62
      %s64 = sphi 0, %s62
      %s65 = sphi 0, %s64
      %s79 = sphi 0, %s65
      %s83 = sphi 0, %s83
      %s85 = sphi 0, %s83
      %s86 = sphi 0, %s85
      %s100 = sphi 0, %s86
      %s104 = sphi 0, %s104
      %s106 = sphi 0, %s104
      %s107 = sphi 0, %s106
      %s121 = sphi 0, %s107
      %s125 = sphi 0, %s125
      %s127 = sphi 0, %s125
      %s128 = sphi 0, %s127
      %s142 = sphi 0, %s128
      %s150 = sphi 0, %s152
      %s153 = sphi 0, %s150
      %s154 = sphi 0, %s153
      %s170 = sphi 0, %s154
    $region4: #{tpu_custom_call.1} parent=1 // loop_header_branch
      %17 = sbr.rel (%p15) target = $region8
    $region5: #{tpu_custom_call.1} parent=1 // loop_body
      %s19 = ssub.s32 %s14, 1
      %s20 = ssub.s32 %s14, 2
      %s27 = sadd.s32 1, %s22
      %p28 = scmp.ge.s32.totalorder %s27, 1
      %s29 = scalar_select %p28, 0, %s27
      %s30 = sadd.s32 1, %s21
      %s31 = scalar_select %p28, %s30, %s21
      %p32 = scmp.ge.s32.totalorder %s31, 2
      %s33 = scalar_select %p32, 0, %s31
      %s34 = ssub.s32 %s21, %s33
      %s35 = ssub.s32 %s22, %s29
      %s36 = sor.u32 %s34, %s35
      %p37 = scmp.eq.s32.totalorder %s36, 0
      %s39 = sadd.s32 %s38, 1
      %s40 = scalar_select %p37, %s38, %s39
      %p43 = pneg %p37
      %p44 = scmp.eq.s32.totalorder %s14, 1
      %p45 = por %p43, %p44
      %p46 = scmp.ne.s32.totalorder %s38, %s41
      %p47 = scmp.eq.s32.totalorder %s14, 0
      %p48 = por %p46, %p47
      %p49 = scmp.ne.s32.totalorder %s38, %s41
      %p50 = scmp.eq.s32.totalorder %s19, 1
      %p51 = por %p49, %p50
      %p52 = scmp.ne.s32.totalorder %s41, %s42
      %p53 = scmp.eq.s32.totalorder %s19, 0
      %p54 = por %p52, %p53
      %p55 = scmp.ne.s32.totalorder %s41, %s42
      %p56 = scmp.eq.s32.totalorder %s20, 1
      %p57 = por %p55, %p56
      %p59 = scmp.ne.s32.totalorder %s42, %s58
      %p60 = scmp.eq.s32.totalorder %s20, 0
      %p61 = por %p59, %p60
      %s63 = sadd.s32 %s62, 1
      %p66 = scmp.eq.s32.totalorder %s14, 1
      %p67 = scmp.ne.s32.totalorder %s62, %s64
      %p68 = scmp.eq.s32.totalorder %s14, 0
      %p69 = por %p67, %p68
      %p70 = scmp.ne.s32.totalorder %s62, %s64
      %p71 = scmp.eq.s32.totalorder %s19, 1
      %p72 = por %p70, %p71
      %p73 = scmp.ne.s32.totalorder %s64, %s65
      %p74 = scmp.eq.s32.totalorder %s19, 0
      %p75 = por %p73, %p74
      %p76 = scmp.ne.s32.totalorder %s64, %s65
      %p77 = scmp.eq.s32.totalorder %s20, 1
      %p78 = por %p76, %p77
      %p80 = scmp.ne.s32.totalorder %s65, %s79
      %p81 = scmp.eq.s32.totalorder %s20, 0
      %p82 = por %p80, %p81
      %s84 = sadd.s32 %s83, 1
      %p87 = scmp.eq.s32.totalorder %s14, 1
      %p88 = scmp.ne.s32.totalorder %s83, %s85
      %p89 = scmp.eq.s32.totalorder %s14, 0
      %p90 = por %p88, %p89
      %p91 = scmp.ne.s32.totalorder %s83, %s85
      %p92 = scmp.eq.s32.totalorder %s19, 1
      %p93 = por %p91, %p92
      %p94 = scmp.ne.s32.totalorder %s85, %s86
      %p95 = scmp.eq.s32.totalorder %s19, 0
      %p96 = por %p94, %p95
      %p97 = scmp.ne.s32.totalorder %s85, %s86
      %p98 = scmp.eq.s32.totalorder %s20, 1
      %p99 = por %p97, %p98
      %p101 = scmp.ne.s32.totalorder %s86, %s100
      %p102 = scmp.eq.s32.totalorder %s20, 0
      %p103 = por %p101, %p102
      %s105 = sadd.s32 %s104, 1
      %p108 = scmp.eq.s32.totalorder %s14, 1
      %p109 = scmp.ne.s32.totalorder %s104, %s106
      %p110 = scmp.eq.s32.totalorder %s14, 0
      %p111 = por %p109, %p110
      %p112 = scmp.ne.s32.totalorder %s104, %s106
      %p113 = scmp.eq.s32.totalorder %s19, 1
      %p114 = por %p112, %p113
      %p115 = scmp.ne.s32.totalorder %s106, %s107
      %p116 = scmp.eq.s32.totalorder %s19, 0
      %p117 = por %p115, %p116
      %p118 = scmp.ne.s32.totalorder %s106, %s107
      %p119 = scmp.eq.s32.totalorder %s20, 1
      %p120 = por %p118, %p119
      %p122 = scmp.ne.s32.totalorder %s107, %s121
      %p123 = scmp.eq.s32.totalorder %s20, 0
      %p124 = por %p122, %p123
      %s126 = sadd.s32 %s125, 1
      %p129 = scmp.eq.s32.totalorder %s14, 1
      %p130 = scmp.ne.s32.totalorder %s125, %s127
      %p131 = scmp.eq.s32.totalorder %s14, 0
      %p132 = por %p130, %p131
      %p133 = scmp.ne.s32.totalorder %s125, %s127
      %p134 = scmp.eq.s32.totalorder %s19, 1
      %p135 = por %p133, %p134
      %p136 = scmp.ne.s32.totalorder %s127, %s128
      %p137 = scmp.eq.s32.totalorder %s19, 0
      %p138 = por %p136, %p137
      %p139 = scmp.ne.s32.totalorder %s127, %s128
      %p140 = scmp.eq.s32.totalorder %s20, 1
      %p141 = por %p139, %p140
      %p143 = scmp.ne.s32.totalorder %s128, %s142
      %p144 = scmp.eq.s32.totalorder %s20, 0
      %p145 = por %p143, %p144
      %s146 = ssub.s32 %s21, %s33
      %s147 = ssub.s32 %s22, %s29
      %s148 = sor.u32 %s146, %s147
      %p149 = scmp.eq.s32.totalorder %s148, 0
      %s151 = sadd.s32 %s150, 1
      %s152 = scalar_select %p149, %s150, %s151
      %p155 = pneg %p149
      %p156 = scmp.eq.s32.totalorder %s14, 1
      %p157 = por %p155, %p156
      %p158 = scmp.ne.s32.totalorder %s150, %s153
      %p159 = scmp.eq.s32.totalorder %s14, 0
      %p160 = por %p158, %p159
      %p161 = scmp.ne.s32.totalorder %s150, %s153
      %p162 = scmp.eq.s32.totalorder %s19, 1
      %p163 = por %p161, %p162
      %p164 = scmp.ne.s32.totalorder %s153, %s154
      %p165 = scmp.eq.s32.totalorder %s19, 0
      %p166 = por %p164, %p165
      %p167 = scmp.ne.s32.totalorder %s153, %s154
      %p168 = scmp.eq.s32.totalorder %s20, 1
      %p169 = por %p167, %p168
      %p171 = scmp.ne.s32.totalorder %s154, %s170
      %p172 = scmp.eq.s32.totalorder %s20, 0
      %p173 = por %p171, %p172
      %p174 = scmp.le.s32.totalorder 1, %s14
      %p175 = scmp.lt.s32.totalorder %s14, 3
      %p176 = pnand %p174, %p175
      %p177 = pneg %p176
      // Predicated region
      $region9: #{tpu_custom_call.1} parent=5 // pred_check
        _
      $region10: #{tpu_custom_call.1} parent=5 // pred_check_branch
        %179 = sbr.rel (%p176) target = $region12
      $region11: #{tpu_custom_call.1} parent=5 // pred_region
        %s180 = ssub.s32 %s14, 1
        // Predicated region
        $region13: #{tpu_custom_call.1} parent=11 // pred_check
          %p181 = pneg %p75
        $region14: #{tpu_custom_call.1} parent=11 // pred_check_branch
          %183 = sbr.rel (%p181) target = $region16
        $region15: #{tpu_custom_call.1} parent=11 // pred_region
          _
        $region16: #{tpu_custom_call.1} parent=11 // pred_fallthru
          _
        // Predicated region
        $region17: #{tpu_custom_call.1} parent=11 // pred_check
          %p184 = pneg %p96
        $region18: #{tpu_custom_call.1} parent=11 // pred_check_branch
          %186 = sbr.rel (%p184) target = $region20
        $region19: #{tpu_custom_call.1} parent=11 // pred_region
          _
        $region20: #{tpu_custom_call.1} parent=11 // pred_fallthru
          _
        // Predicated region
        $region21: #{tpu_custom_call.1} parent=11 // pred_check
          %p187 = pneg %p117
        $region22: #{tpu_custom_call.1} parent=11 // pred_check_branch
          %189 = sbr.rel (%p187) target = $region24
        $region23: #{tpu_custom_call.1} parent=11 // pred_region
          _
        $region24: #{tpu_custom_call.1} parent=11 // pred_fallthru
          _
        // Predicated region
        $region25: #{tpu_custom_call.1} parent=11 // pred_check
          %p190 = pneg %p138
        $region26: #{tpu_custom_call.1} parent=11 // pred_check_branch
          %192 = sbr.rel (%p190) target = $region28
        $region27: #{tpu_custom_call.1} parent=11 // pred_region
          _
        $region28: #{tpu_custom_call.1} parent=11 // pred_fallthru
          _
      $region12: #{tpu_custom_call.1} parent=5 // pred_fallthru
        _
      %p193 = scmp.lt.s32.totalorder %s14, 2
      // Predicated region
      $region29: #{tpu_custom_call.1} parent=5 // pred_check
        %p194 = pneg %p193
      $region30: #{tpu_custom_call.1} parent=5 // pred_check_branch
        %196 = sbr.rel (%p194) target = $region32
      $region31: #{tpu_custom_call.1} parent=5 // pred_region
        // Predicated region
        $region33: #{tpu_custom_call.1} parent=31 // pred_check
          %p197 = pneg %p48
        $region34: #{tpu_custom_call.1} parent=31 // pred_check_branch
          %199 = sbr.rel (%p197) target = $region36
        $region35: #{tpu_custom_call.1} parent=31 // pred_region
          %s200 = smul.u32 2, %s22
          %p201 = scmp.lt.s32.totalorder %s21, 1
          %s202 = scalar_select %p201, %s21, 1
          %p203 = scmp.lt.s32.totalorder %s200, 1
          %s204 = scalar_select %p203, %s200, 1
          %s205 = smul.addr %s202, 2
          %s206 = sadd.s32 %s204, %s205
          %s207 = smul.addr %s206, 4
          %s208 = scalar_lea.vmem %s0, %s207
          %s209 = smul.u32 2, %s22
        $region36: #{tpu_custom_call.1} parent=31 // pred_fallthru
          _
      $region32: #{tpu_custom_call.1} parent=5 // pred_fallthru
        _
      %p210 = scmp.le.s32.totalorder 1, %s14
      %p211 = scmp.lt.s32.totalorder %s14, 3
      %p212 = pnand %p210, %p211
      %p213 = pneg %p212
      // Predicated region
      $region37: #{tpu_custom_call.1} parent=5 // pred_check
        _
      $region38: #{tpu_custom_call.1} parent=5 // pred_check_branch
        %215 = sbr.rel (%p212) target = $region40
      $region39: #{tpu_custom_call.1} parent=5 // pred_region
        %s216 = ssub.s32 %s14, 1
        %s217 = smul.u32 2, %s24
        %p218 = scmp.lt.s32.totalorder %s23, 1
        %s219 = scalar_select %p218, %s23, 1
        %p220 = scmp.lt.s32.totalorder %s217, 1
        %s221 = scalar_select %p220, %s217, 1
        %s222 = smul.addr %s219, 2
        %s223 = sadd.s32 %s221, %s222
        %s224 = smul.addr %s223, 4
        %s225 = scalar_lea.vmem %s0, %s224
        %p226 = pneg %p54
        %p227 = pneg %p51
        %p228 = pneg %p75
        %p229 = pneg %p72
        %p230 = pneg %p96
        %p231 = pneg %p93
        %p232 = pneg %p117
        %p233 = pneg %p114
        %p234 = pneg %p138
        %p235 = pneg %p135
        %p236 = pneg %p166
        %p237 = pneg %p163
        %s238 = sand.u32 %s153, 1
        %s239 = scalar_lea.sflag [#allocation3], %s238
        %s240 = sand.u32 %s153, 1
        %s241 = smul.addr %s240, 8
        %s242 = scalar_lea.vmem [#allocation2], %s241
        %s243 = smul.u32 2, %s24
        %p244 = scmp.lt.s32.totalorder %s23, 1
        %s245 = scalar_select %p244, %s23, 1
        %p246 = scmp.lt.s32.totalorder %s243, 1
        %s247 = scalar_select %p246, %s243, 1
        %s248 = smul.addr %s245, 2
        %s249 = sadd.s32 %s247, %s248
        %s250 = smul.addr %s249, 4
        %s251 = scalar_lea.vmem %s0, %s250
        %s252 = smul.u32 2, %s24
        %s253 = smul.u32 2, %s24
        %v254 = vld [vmem:[%s251] sm:$0xff]
        %v255 = vld [vmem:[%s1] sm:$0xff]
        %v256 = vld [vmem:[%s1 + $0x8] sm:$0xff]
        %v257 = vld [vmem:[%s1 + $0x10] sm:$0xff]
        %v258 = vld [vmem:[%s1 + $0x18] sm:$0xff]
        %v259 = vld [vmem:[%s2] sm:$0xff]
        %v260 = vld [vmem:[%s2 + $0x8] sm:$0xff]
        %v261 = vld [vmem:[%s2 + $0x10] sm:$0xff]
        %v262 = vld [vmem:[%s2 + $0x18] sm:$0xff]
        %264 = vset.pattern.permute.xlu0 0
        %265 = vperm.xlu0 %264, %v259
        %v266 = vpop.permute.xlu0 %265
        %269 = vset.pattern.permute.xlu0 0
        %270 = vperm.xlu0 %269, %v260
        %v271 = vpop.permute.xlu0 %270
        %274 = vset.pattern.permute.xlu0 0
        %275 = vperm.xlu0 %274, %v261
        %v276 = vpop.permute.xlu0 %275
        %279 = vset.pattern.permute.xlu0 0
        %280 = vperm.xlu0 %279, %v262
        %v281 = vpop.permute.xlu0 %280
        %v284 = vcombine.high %v254, %v254
        %vm285 = vcmask 31744
        %v287 = vsel %vm285, %v255, 0
        %v290 = vsel %vm285, %v256, 0
        %v293 = vsel %vm285, %v257, 0
        %v296 = vsel %vm285, %v258, 0
        %vm298 = vcmask 1043456
        %v299 = vsel %vm298, %v254, 0
        %v301 = vsel %vm298, %v284, 0
        %303 = vmatprep.subr.mxu0 %v301
        %304 = vmatpush1.msra.mxu0 %v299
        %305 = vmatprep.subr.mxu0 0.0
        %306 = vmatpush1.msra.mxu0 0.0
        %307 = vmatprep.subr.mxu0 0.0
        %308 = vmatpush1.msra.mxu0 0.0
        %309 = vmatprep.subr.mxu0 0.0
        %310 = vmatpush1.msra.mxu0 0.0
        %311 = vmatprep.subr.mxu0 0.0
        %312 = vmatpush1.msra.mxu0 0.0
        %313 = vmatprep.subr.mxu0 0.0
        %314 = vmatpush1.msra.mxu0 0.0
        %315 = vmatprep.subr.mxu0 0.0
        %316 = vmatpush1.msra.mxu0 0.0
        %317 = vmatprep.subr.mxu0 0.0
        %318 = vmatpush1.msra.mxu0 0.0
        %319 = vmatprep.subr.mxu0 0.0
        %320 = vmatpush1.msra.mxu0 0.0
        %321 = vmatprep.subr.mxu0 0.0
        %322 = vmatpush1.msra.mxu0 0.0
        %323 = vmatprep.subr.mxu0 0.0
        %324 = vmatpush1.msra.mxu0 0.0
        %325 = vmatprep.subr.mxu0 0.0
        %326 = vmatpush1.msra.mxu0 0.0
        %327 = vmatprep.subr.mxu0 0.0
        %328 = vmatpush1.msra.mxu0 0.0
        %329 = vmatprep.subr.mxu0 0.0
        %330 = vmatpush1.msra.mxu0 0.0
        %331 = vmatprep.subr.mxu0 0.0
        %332 = vmatpush1.msra.mxu0 0.0
        %333 = vmatprep.subr.mxu0 0.0
        %334 = vmatpush1.msra.mxu0 0.0
        %335 = vmatprep.subr.mxu0 0.0
        %336 = vmatpush1.msra.mxu0 0.0
        %337 = vmatprep.subr.mxu0 0.0
        %338 = vmatpush1.msra.mxu0 0.0
        %339 = vmatprep.subr.mxu0 0.0
        %340 = vmatpush1.msra.mxu0 0.0
        %341 = vmatprep.subr.mxu0 0.0
        %342 = vmatpush1.msra.mxu0 0.0
        %343 = vmatprep.subr.mxu0 0.0
        %344 = vmatpush1.msra.mxu0 0.0
        %345 = vmatprep.subr.mxu0 0.0
        %346 = vmatpush1.msra.mxu0 0.0
        %347 = vmatprep.subr.mxu0 0.0
        %348 = vmatpush1.msra.mxu0 0.0
        %349 = vmatprep.subr.mxu0 0.0
        %350 = vmatpush1.msra.mxu0 0.0
        %351 = vmatprep.subr.mxu0 0.0
        %352 = vmatpush1.msra.mxu0 0.0
        %353 = vmatprep.subr.mxu0 0.0
        %354 = vmatpush1.msra.mxu0 0.0
        %355 = vmatprep.subr.mxu0 0.0
        %356 = vmatpush1.msra.mxu0 0.0
        %357 = vmatprep.subr.mxu0 0.0
        %358 = vmatpush1.msra.mxu0 0.0
        %359 = vmatprep.subr.mxu0 0.0
        %360 = vmatpush1.msra.mxu0 0.0
        %361 = vmatprep.subr.mxu0 0.0
        %362 = vmatpush1.msra.mxu0 0.0
        %363 = vmatprep.subr.mxu0 0.0
        %364 = vmatpush1.msra.mxu0 0.0
        %365 = vmatprep.subr.mxu0 0.0
        %366 = vmatpush1.msra.mxu0 0.0
        %367 = vmatprep.mubr.f32.mxu0 0.0
        %368 = vmatmul.mubr.f32.gmra.mrb[0].mxu0 %v287
        %v369 = vpop.f32.mrb[0].mxu0
        %v370 = vadd.f32 %v266, %v369
        %v371 = vpop.f32.mrb[0].mxu0
        %v372 = vadd.f32 %v266, %v371
        %373 = vmatprep.mubr.f32.mxu0 0.0
        %374 = vmatmul.mubr.f32.gmra.mrb[0].mxu0 %v290
        %v375 = vpop.f32.mrb[0].mxu0
        %v376 = vadd.f32 %v271, %v375
        %v377 = vpop.f32.mrb[0].mxu0
        %v378 = vadd.f32 %v271, %v377
        %379 = vmatprep.mubr.f32.mxu0 0.0
        %380 = vmatmul.mubr.f32.gmra.mrb[0].mxu0 %v293
        %v381 = vpop.f32.mrb[0].mxu0
        %v382 = vadd.f32 %v276, %v381
        %v383 = vpop.f32.mrb[0].mxu0
        %v384 = vadd.f32 %v276, %v383
        %385 = vmatprep.mubr.f32.mxu0 0.0
        %386 = vmatmul.mubr.f32.gmra.mrb[0].mxu0 %v296
        %v387 = vpop.f32.mrb[0].mxu0
        %v388 = vadd.f32 %v281, %v387
        %v389 = vpop.f32.mrb[0].mxu0
        %v390 = vadd.f32 %v281, %v389
        %391 = vdwg.mxu0
        %v392 = vmul.f32 %v370, 0.5
        %v393 = vmul.f32 %v372, 0.5
        %v394 = vmul.f32 %v376, 0.5
        %v395 = vmul.f32 %v378, 0.5
        %v396 = vmul.f32 %v382, 0.5
        %v397 = vmul.f32 %v384, 0.5
        %v398 = vmul.f32 %v388, 0.5
        %v399 = vmul.f32 %v390, 0.5
        %v400 = vmul.f32 %v370, 0.044715
        %v401 = vmul.f32 %v372, 0.044715
        %v402 = vmul.f32 %v376, 0.044715
        %v403 = vmul.f32 %v378, 0.044715
        %v404 = vmul.f32 %v382, 0.044715
        %v405 = vmul.f32 %v384, 0.044715
        %v406 = vmul.f32 %v388, 0.044715
        %v407 = vmul.f32 %v390, 0.044715
        %v408 = vmul.f32 %v400, %v370
        %v409 = vmul.f32 %v401, %v372
        %v410 = vmul.f32 %v402, %v376
        %v411 = vmul.f32 %v403, %v378
        %v412 = vmul.f32 %v404, %v382
        %v413 = vmul.f32 %v405, %v384
        %v414 = vmul.f32 %v406, %v388
        %v415 = vmul.f32 %v407, %v390
        %v416 = vmul.f32 %v408, %v370
        %v417 = vmul.f32 %v409, %v372
        %v418 = vmul.f32 %v410, %v376
        %v419 = vmul.f32 %v411, %v378
        %v420 = vmul.f32 %v412, %v382
        %v421 = vmul.f32 %v413, %v384
        %v422 = vmul.f32 %v414, %v388
        %v423 = vmul.f32 %v415, %v390
        %v424 = vadd.f32 %v370, %v416
        %v425 = vadd.f32 %v372, %v417
        %v426 = vadd.f32 %v376, %v418
        %v427 = vadd.f32 %v378, %v419
        %v428 = vadd.f32 %v382, %v420
        %v429 = vadd.f32 %v384, %v421
        %v430 = vadd.f32 %v388, %v422
        %v431 = vadd.f32 %v390, %v423
        %v432 = vmul.f32 %v424, 0.7978846
        %v433 = vmul.f32 %v425, 0.7978846
        %v434 = vmul.f32 %v426, 0.7978846
        %v435 = vmul.f32 %v427, 0.7978846
        %v436 = vmul.f32 %v428, 0.7978846
        %v437 = vmul.f32 %v429, 0.7978846
        %v438 = vmul.f32 %v430, 0.7978846
        %v439 = vmul.f32 %v431, 0.7978846
        %v440 = vtanh.pop %v432
        %v441 = vtanh.pop %v433
        %v442 = vtanh.pop %v434
        %v443 = vtanh.pop %v435
        %v444 = vtanh.pop %v436
        %v445 = vtanh.pop %v437
        %v446 = vtanh.pop %v438
        %v447 = vtanh.pop %v439
        %v448 = vadd.f32 %v440, 1.0
        %v449 = vadd.f32 %v441, 1.0
        %v450 = vadd.f32 %v442, 1.0
        %v451 = vadd.f32 %v443, 1.0
        %v452 = vadd.f32 %v444, 1.0
        %v453 = vadd.f32 %v445, 1.0
        %v454 = vadd.f32 %v446, 1.0
        %v455 = vadd.f32 %v447, 1.0
        %v456 = vmul.f32 %v392, %v448
        %v457 = vmul.f32 %v393, %v449
        %v458 = vmul.f32 %v394, %v450
        %v459 = vmul.f32 %v395, %v451
        %v460 = vmul.f32 %v396, %v452
        %v461 = vmul.f32 %v397, %v453
        %v462 = vmul.f32 %v398, %v454
        %v463 = vmul.f32 %v399, %v455
        %v464 = vld [vmem:[%s3] sm:$0xf]
        %v465 = vld [vmem:[%s4] sm:$0xf]
        %467 = vset.pattern.permute.xlu0 0
        %468 = vperm.xlu0 %467, %v465
        %v469 = vpop.permute.xlu0 %468
        %vm471 = vcmask 261120
        %v473 = vsel %vm471, %v464, 0
        %475 = vmatprep.subr.mxu0 %v457
        %476 = vmatpush1.msra.mxu0 %v456
        %477 = vmatprep.subr.mxu0 %v459
        %478 = vmatpush1.msra.mxu0 %v458
        %479 = vmatprep.subr.mxu0 %v461
        %480 = vmatpush1.msra.mxu0 %v460
        %481 = vmatprep.subr.mxu0 %v463
        %482 = vmatpush1.msra.mxu0 %v462
        %483 = vmatprep.subr.mxu0 0.0
        %484 = vmatpush1.msra.mxu0 0.0
        %485 = vmatprep.subr.mxu0 0.0
        %486 = vmatpush1.msra.mxu0 0.0
        %487 = vmatprep.subr.mxu0 0.0
        %488 = vmatpush1.msra.mxu0 0.0
        %489 = vmatprep.subr.mxu0 0.0
        %490 = vmatpush1.msra.mxu0 0.0
        %491 = vmatprep.subr.mxu0 0.0
        %492 = vmatpush1.msra.mxu0 0.0
        %493 = vmatprep.subr.mxu0 0.0
        %494 = vmatpush1.msra.mxu0 0.0
        %495 = vmatprep.subr.mxu0 0.0
        %496 = vmatpush1.msra.mxu0 0.0
        %497 = vmatprep.subr.mxu0 0.0
        %498 = vmatpush1.msra.mxu0 0.0
        %499 = vmatprep.subr.mxu0 0.0
        %500 = vmatpush1.msra.mxu0 0.0
        %501 = vmatprep.subr.mxu0 0.0
        %502 = vmatpush1.msra.mxu0 0.0
        %503 = vmatprep.subr.mxu0 0.0
        %504 = vmatpush1.msra.mxu0 0.0
        %505 = vmatprep.subr.mxu0 0.0
        %506 = vmatpush1.msra.mxu0 0.0
        %507 = vmatprep.subr.mxu0 0.0
        %508 = vmatpush1.msra.mxu0 0.0
        %509 = vmatprep.subr.mxu0 0.0
        %510 = vmatpush1.msra.mxu0 0.0
        %511 = vmatprep.subr.mxu0 0.0
        %512 = vmatpush1.msra.mxu0 0.0
        %513 = vmatprep.subr.mxu0 0.0
        %514 = vmatpush1.msra.mxu0 0.0
        %515 = vmatprep.subr.mxu0 0.0
        %516 = vmatpush1.msra.mxu0 0.0
        %517 = vmatprep.subr.mxu0 0.0
        %518 = vmatpush1.msra.mxu0 0.0
        %519 = vmatprep.subr.mxu0 0.0
        %520 = vmatpush1.msra.mxu0 0.0
        %521 = vmatprep.subr.mxu0 0.0
        %522 = vmatpush1.msra.mxu0 0.0
        %523 = vmatprep.subr.mxu0 0.0
        %524 = vmatpush1.msra.mxu0 0.0
        %525 = vmatprep.subr.mxu0 0.0
        %526 = vmatpush1.msra.mxu0 0.0
        %527 = vmatprep.subr.mxu0 0.0
        %528 = vmatpush1.msra.mxu0 0.0
        %529 = vmatprep.subr.mxu0 0.0
        %530 = vmatpush1.msra.mxu0 0.0
        %531 = vmatprep.subr.mxu0 0.0
        %532 = vmatpush1.msra.mxu0 0.0
        %533 = vmatprep.subr.mxu0 0.0
        %534 = vmatpush1.msra.mxu0 0.0
        %535 = vmatprep.subr.mxu0 0.0
        %536 = vmatpush1.msra.mxu0 0.0
        %537 = vmatprep.subr.mxu0 0.0
        %538 = vmatpush1.msra.mxu0 0.0
        %539 = vmatprep.mubr.f32.mxu0 0.0
        %540 = vmatmul.mubr.f32.gmra.mrb[0].mxu0 %v473
        %v541 = vpop.f32.mrb[0].mxu0
        %v542 = vadd.f32 %v469, %v541
        %v543 = vpop.f32.mrb[0].mxu0
        %v544 = vadd.f32 %v469, %v543
        %545 = vdwg.mxu0
        %v548 = vcombine.low %v542, %v544
        %550 = vst [vmem:[%s242] sm:$0xff] %v548
        %s551 = sand.u32 %s153, 1
        %s552 = scalar_lea.sflag [#allocation3], %s551
        %s553 = sand.u32 %s153, 1
        %s554 = smul.addr %s553, 8
        %s555 = scalar_lea.vmem [#allocation2], %s554
        // Predicated region
        $region41: #{tpu_custom_call.1} parent=39 // pred_check
          %p556 = pneg %p163
        $region42: #{tpu_custom_call.1} parent=39 // pred_check_branch
          %558 = sbr.rel (%p556) target = $region44
        $region43: #{tpu_custom_call.1} parent=39 // pred_region
          %s559 = smul.u32 2, %s24
          %s561 = ssub.s32 128, 128
          %562 = vsyncadd %s552, %s561
          %s563 = smul.addr %s23, 2
          %s564 = sadd.s32 %s559, %s563
          %s565 = smul.addr %s564, 64
          %s566 = scalar_lea.hbm %s5, %s565
          %s568 = sshll.u32 %s555, 4
          %s569 = int_to_ptr.vmem [resolvable:$true] %s568
          %571 = dma.vmem_to_hbm [thread:$0]  %s569, 128, %s566, %s552
        $region44: #{tpu_custom_call.1} parent=39 // pred_fallthru
          _
      $region40: #{tpu_custom_call.1} parent=5 // pred_fallthru
        _
      %p572 = scmp.le.s32.totalorder 2, %s14
      // Predicated region
      $region45: #{tpu_custom_call.1} parent=5 // pred_check
        %p573 = pneg %p572
      $region46: #{tpu_custom_call.1} parent=5 // pred_check_branch
        %575 = sbr.rel (%p573) target = $region48
      $region47: #{tpu_custom_call.1} parent=5 // pred_region
        %s576 = ssub.s32 %s14, 2
        // Predicated region
        $region49: #{tpu_custom_call.1} parent=47 // pred_check
          %p577 = pneg %p169
        $region50: #{tpu_custom_call.1} parent=47 // pred_check_branch
          %579 = sbr.rel (%p577) target = $region52
        $region51: #{tpu_custom_call.1} parent=47 // pred_region
          %s580 = sand.u32 %s154, 1
          %s581 = scalar_lea.sflag [#allocation3], %s580
          %s582 = sand.u32 %s154, 1
          %s583 = smul.addr %s582, 8
          %s584 = scalar_lea.vmem [#allocation2], %s583
          %585 = dma.done %s581, 128
        $region52: #{tpu_custom_call.1} parent=47 // pred_fallthru
          _
      $region48: #{tpu_custom_call.1} parent=5 // pred_fallthru
        _
    $region6: #{tpu_custom_call.1} parent=1 // loop_footer
      %s18 = sadd.s32 1, %s14
    $region7: #{tpu_custom_call.1} parent=1 // loop_footer_branch
      %13 = sbr.rel target = $region3
    $region8: #{tpu_custom_call.1} parent=1 // loop_exit
      _
    %586 = vsyncpa [#allocation3], 1
    %s587 = scalar_lea.sflag [#allocation3], 1
    %588 = vsyncpa %s587, 1

</llo_original>
